<compile_context>
chip_gen: v6e
topology: v6e:2x2x1
jax: 0.10.0
libtpu: 0.0.40
codegen_flags: <defaults>
</compile_context>

<pallas_src>
import functools

import jax
import jax.numpy as jnp
from jax import lax
from jax.experimental import pallas as pl
from jax.experimental.pallas import tpu as pltpu


def _round_up(x, m):
    return ((x + m - 1) // m) * m


def _packed_embed_kernel(idx_ref, table_ref, out_ref):
    # idx_ref:   (TR, PACK) int32 -- PACK edge ids per packed row; per-slot
    #                                offsets (p * num_types) already added.
    # table_ref: (PACK*num_types, PACK*emb_dim) -- block-diagonal table.
    # out_ref:   (TR, PACK*emb_dim)             -- lane-dense output tile.
    tr, pack = idx_ref.shape
    k = table_ref.shape[0]

    k_iota = lax.broadcasted_iota(jnp.int32, (tr, k), 1)
    multihot = jnp.zeros((tr, k), table_ref.dtype)
    for p in range(pack):  # static, tiny unroll (PACK <= 16); slots are disjoint
        multihot = multihot + (idx_ref[:, p:p + 1] == k_iota).astype(table_ref.dtype)

    out_ref[...] = jnp.dot(
        multihot, table_ref[...], preferred_element_type=jnp.float32
    ).astype(out_ref.dtype)


def _block_diag_table(table, pack):
    num_types, emb_dim = table.shape
    if pack == 1:
        return table
    big = jnp.zeros((pack * num_types, pack * emb_dim), table.dtype)
    for p in range(pack):
        big = big.at[p * num_types:(p + 1) * num_types,
                     p * emb_dim:(p + 1) * emb_dim].set(table)
    return big


@functools.partial(jax.jit, static_argnames=("tile_edges", "min_pallas_edges"))
def type_dict_edge_encoder(edge_attr, table, *, tile_edges=4096,
                           min_pallas_edges=4096):
    """edge_attr: int [E], table: float32 [num_types, emb_dim] -> [E, emb_dim]."""
    E = edge_attr.shape[0]
    num_types, emb_dim = table.shape
    idx = edge_attr.astype(jnp.int32)

    if E == 0:
        return jnp.zeros((0, emb_dim), table.dtype)

    # Small-E fast path: pallas_call launch + padding dominates below a few
    # thousand edges; XLA's native gather is faster there.
    if E < min_pallas_edges:
        return jnp.take(table, idx, axis=0)

    # Pack PACK edges into one 128-lane output row when emb_dim divides 128.
    pack = 128 // emb_dim if (emb_dim <= 128 and 128 % emb_dim == 0) else 1
    unit = 8 * pack  # minimum edge granularity: 8 sublane rows per tile

    # Big tiles to amortize ~0.35us/grid-step overhead; cap so the
    # double-buffered f32 output tile stays well under scoped VMEM on all
    # generations (v7x: 64 MiB physical / 32 MiB scoped by default).
    vmem_cap_edges = max(unit, ((8 * 1024 * 1024) // (2 * emb_dim * 4)) // unit * unit)
    tile = min(tile_edges, vmem_cap_edges)
    tile = min(_round_up(tile, unit), _round_up(E, unit))
    E_pad = _round_up(E, tile)

    rows = E_pad // pack
    tile_rows = tile // pack          # multiple of 8 by construction
    n_lanes = pack * emb_dim

    # Pad with index 0 (padded rows compute table[0]; sliced off below), pack
    # `pack` edges per row, and pre-add per-slot offsets p * num_types so the
    # kernel gathers from the block-diagonal table with one multi-hot matmul.
    idx_p = jnp.pad(idx, (0, E_pad - E))
    offsets = (jnp.arange(pack, dtype=jnp.int32) * num_types)[None, :]
    idx2d = idx_p.reshape(rows, pack) + offsets

    big_table = _block_diag_table(table, pack)
    k_dim = big_table.shape[0]

    out = pl.pallas_call(
        _packed_embed_kernel,
        out_shape=jax.ShapeDtypeStruct((rows, n_lanes), table.dtype),
        grid_spec=pltpu.PrefetchScalarGridSpec(
            num_scalar_prefetch=0,
            grid=(rows // tile_rows,),
            in_specs=[
                pl.BlockSpec((tile_rows, pack), lambda i: (i, 0)),
                # Table block index is constant -> re-fetch elided across steps.
                pl.BlockSpec((k_dim, n_lanes), lambda i: (0, 0)),
            ],
            out_specs=pl.BlockSpec((tile_rows, n_lanes), lambda i: (i, 0)),
        ),
        compiler_params=pltpu.CompilerParams(
            dimension_semantics=("parallel",),  # edge axis can split across TCs (v7x)
        ),
    )(idx2d, big_table)

    # (rows, pack*emb_dim) is the same row-major memory as (E_pad, emb_dim).
    return out.reshape(E_pad, emb_dim)[:E]


if __name__ == "__main__":
    key = jax.random.PRNGKey(0)
    k_table, k_idx, k_idx2 = jax.random.split(key, 3)

    num_types = 16   # cfg.dataset.edge_encoder_num_types
    emb_dim = 32
    num_edges = 128

    # Deterministic synthetic parameters (torch.nn.Embedding weight analogue).
    table = jax.random.normal(k_table, (num_types, emb_dim), jnp.float32)
    edge_attr = jax.random.randint(k_idx, (num_edges,), 0, num_types, jnp.int32)

    # Force the Pallas path even at small E so the kernel actually runs.
    out = type_dict_edge_encoder(edge_attr, table, min_pallas_edges=0)
    out = jax.block_until_ready(out)
    ref = jnp.take(table, edge_attr, axis=0)
    assert out.shape == (num_edges, emb_dim)
    assert jnp.allclose(out, ref, atol=1e-6), "mismatch vs reference (small E)"

    # Multi-tile path with padding (E not a multiple of the tile).
    big_edges = 5000
    edge_attr2 = jax.random.randint(k_idx2, (big_edges,), 0, num_types, jnp.int32)
    out2 = jax.block_until_ready(
        type_dict_edge_encoder(edge_attr2, table, min_pallas_edges=0))
    ref2 = jnp.take(table, edge_attr2, axis=0)
    assert out2.shape == (big_edges, emb_dim)
    assert jnp.allclose(out2, ref2, atol=1e-6), "mismatch vs reference (multi-tile)"

    print("KERNEL_OK")
</pallas_src>

<mosaic_0001>
module attributes {stable_mosaic.version = 11 : i64} {
  func.func @_packed_embed_kernel(%arg0: i32, %arg1: memref<32x4xi32, #tpu.memory_space<vmem>>, %arg2: memref<64x128xf32, #tpu.memory_space<vmem>>, %arg3: memref<32x128xf32, #tpu.memory_space<vmem>>) attributes {dimension_semantics = [#tpu.dimension_semantics<parallel>], iteration_bounds = array<i64: 1>, scalar_prefetch = 0 : i64, scratch_operands = 0 : i64, tpu.core_type = #tpu.core_type<tc>, window_params = [{transform_indices = @transform_0, window_bounds = array<i64: 32, 4>}, {pipeline_mode = #tpu.pipeline_mode<synchronous>, transform_indices = @transform_1, window_bounds = array<i64: 64, 128>}, {transform_indices = @transform_2, window_bounds = array<i64: 32, 128>}]} {
    %0 = tpu.iota {dimensions = array<i32: 1>} : vector<32x64xi32>
    %cst = arith.constant 0.000000e+00 : f32
    %1 = vector.broadcast %cst : f32 to vector<32x64xf32>
    %c0 = arith.constant 0 : index
    %c0_0 = arith.constant 0 : index
    %2 = vector.load %arg1[%c0, %c0_0] : memref<32x4xi32, #tpu.memory_space<vmem>>, vector<32x1xi32>
    %3 = vector.broadcast %2 : vector<32x1xi32> to vector<32x64xi32>
    %4 = arith.cmpi eq, %3, %0 : vector<32x64xi32>
    %5 = arith.extui %4 : vector<32x64xi1> to vector<32x64xi32>
    %6 = arith.sitofp %5 : vector<32x64xi32> to vector<32x64xf32>
    %7 = arith.addf %1, %6 : vector<32x64xf32>
    %c0_1 = arith.constant 0 : index
    %c1 = arith.constant 1 : index
    %8 = vector.load %arg1[%c0_1, %c1] : memref<32x4xi32, #tpu.memory_space<vmem>>, vector<32x1xi32>
    %9 = vector.broadcast %8 : vector<32x1xi32> to vector<32x64xi32>
    %10 = arith.cmpi eq, %9, %0 : vector<32x64xi32>
    %11 = arith.extui %10 : vector<32x64xi1> to vector<32x64xi32>
    %12 = arith.sitofp %11 : vector<32x64xi32> to vector<32x64xf32>
    %13 = arith.addf %7, %12 : vector<32x64xf32>
    %c0_2 = arith.constant 0 : index
    %c2 = arith.constant 2 : index
    %14 = vector.load %arg1[%c0_2, %c2] : memref<32x4xi32, #tpu.memory_space<vmem>>, vector<32x1xi32>
    %15 = vector.broadcast %14 : vector<32x1xi32> to vector<32x64xi32>
    %16 = arith.cmpi eq, %15, %0 : vector<32x64xi32>
    %17 = arith.extui %16 : vector<32x64xi1> to vector<32x64xi32>
    %18 = arith.sitofp %17 : vector<32x64xi32> to vector<32x64xf32>
    %19 = arith.addf %13, %18 : vector<32x64xf32>
    %c0_3 = arith.constant 0 : index
    %c3 = arith.constant 3 : index
    %20 = vector.load %arg1[%c0_3, %c3] : memref<32x4xi32, #tpu.memory_space<vmem>>, vector<32x1xi32>
    %21 = vector.broadcast %20 : vector<32x1xi32> to vector<32x64xi32>
    %22 = arith.cmpi eq, %21, %0 : vector<32x64xi32>
    %23 = arith.extui %22 : vector<32x64xi1> to vector<32x64xi32>
    %24 = arith.sitofp %23 : vector<32x64xi32> to vector<32x64xf32>
    %25 = arith.addf %19, %24 : vector<32x64xf32>
    %c0_4 = arith.constant 0 : index
    %c0_5 = arith.constant 0 : index
    %26 = vector.load %arg2[%c0_4, %c0_5] : memref<64x128xf32, #tpu.memory_space<vmem>>, vector<64x128xf32>
    %cst_6 = arith.constant dense<0.000000e+00> : vector<32x128xf32>
    %27 = tpu.matmul %25, %26, %cst_6 {dimension_numbers = #tpu.dot_dimension_numbers<[1], [0], [0], [1], [0, 0, 1, 1], [], []>} : vector<32x64xf32>, vector<64x128xf32>, vector<32x128xf32> -> vector<32x128xf32>
    %c0_7 = arith.constant 0 : index
    %c0_8 = arith.constant 0 : index
    %28 = vector.load %arg3[%c0_7, %c0_8] : memref<32x128xf32, #tpu.memory_space<vmem>>, vector<32x128xf32>
    tpu.vector_store %arg3[%c0_7, %c0_8], %27 {strides = array<i32>} : memref<32x128xf32, #tpu.memory_space<vmem>>, vector<32x128xf32>,
    return
  }
  func.func @transform_0(%arg0: i32) -> (i32, i32) {
    %c0_i32 = arith.constant 0 : i32
    %c0_i32_0 = arith.constant 0 : i32
    return %arg0, %c0_i32 : i32, i32
  }
  func.func @transform_1(%arg0: i32) -> (i32, i32) {
    %c0_i32 = arith.constant 0 : i32
    %c0_i32_0 = arith.constant 0 : i32
    %c0_i32_1 = arith.constant 0 : i32
    return %c0_i32, %c0_i32_0 : i32, i32
  }
  func.func @transform_2(%arg0: i32) -> (i32, i32) {
    %c0_i32 = arith.constant 0 : i32
    %c0_i32_0 = arith.constant 0 : i32
    return %arg0, %c0_i32 : i32, i32
  }
}

</mosaic_0001>

<llo_original>
// kernel: type_dict_edge_encoder.1
$region0: #{type_dict_edge_encoder.1}
  #allocation0 [shape = 'u32[]', space=smem, size = 0x4, offset = 0x4, fixed_abs, tag = 'smem constant byte address 0x4 - core index']
  #allocation1 [shape = 'u32[144,128]{1,0:T(1,128)}', space=vmem, size = 0x12000, scoped, tag = 'internal scratch']
  %s0 = inlined_call_operand.vmem [shape: s32[32,4], index: 0, kind: input, shape index: {}]
  %s1 = inlined_call_operand.vmem [shape: f32[64,128], index: 1, kind: input, shape index: {}]
  %s2 = inlined_call_operand.vmem [shape: f32[32,128], index: 2, kind: output, shape index: {}]
  %s3 = sld [smem:[#allocation0]]
  $region18: #{type_dict_edge_encoder.1} parent=0
    _
  %s5 = ssub.s32 1, %s3
  %s6 = scalar_select 0, %s5, %s3
  // Predicated region
  $region2: #{type_dict_edge_encoder.1} parent=0 // pred_check
    _
  $region3: #{type_dict_edge_encoder.1} parent=0 // pred_check_branch
    %8 = sbr.rel (0) target = $region5
  $region4: #{type_dict_edge_encoder.1} parent=0 // pred_region
    _
  $region5: #{type_dict_edge_encoder.1} parent=0 // pred_fallthru
    _
  // Predicated region
  $region6: #{type_dict_edge_encoder.1} parent=0 // pred_check
    _
  $region7: #{type_dict_edge_encoder.1} parent=0 // pred_check_branch
    %10 = sbr.rel (0) target = $region9
  $region8: #{type_dict_edge_encoder.1} parent=0 // pred_region
    _
  $region9: #{type_dict_edge_encoder.1} parent=0 // pred_fallthru
    _
  %v11 = vlaneseq
  %v12 = vand.u32 %v11, 127
  %v13 = vld [vmem:[%s0] sm:$0xff]
  %v14 = vld [vmem:[%s0 + $0x8] sm:$0xff]
  %v15 = vld [vmem:[%s0 + $0x10] sm:$0xff]
  %v16 = vld [vmem:[%s0 + $0x18] sm:$0xff]
  %17 = vset.pattern.permute.xlu0 0
  %18 = vperm.xlu0 %17, %v13
  %v19 = vpop.permute.xlu0 %18
  %20 = vset.pattern.permute.xlu0 0
  %21 = vperm.xlu0 %20, %v14
  %v22 = vpop.permute.xlu0 %21
  %23 = vset.pattern.permute.xlu0 0
  %24 = vperm.xlu0 %23, %v15
  %v25 = vpop.permute.xlu0 %24
  %26 = vset.pattern.permute.xlu0 0
  %27 = vperm.xlu0 %26, %v16
  %v28 = vpop.permute.xlu0 %27
  %vm29 = vcmp.eq.s32.totalorder %v19, %v12
  %vm30 = vcmp.eq.s32.totalorder %v22, %v12
  %vm31 = vcmp.eq.s32.totalorder %v25, %v12
  %vm32 = vcmp.eq.s32.totalorder %v28, %v12
  %v33 = vsel %vm29, 1, 0
  %v34 = vsel %vm30, 1, 0
  %v35 = vsel %vm31, 1, 0
  %v36 = vsel %vm32, 1, 0
  %v37 = vcvt.s32.f32 %v33
  %v38 = vcvt.s32.f32 %v34
  %v39 = vcvt.s32.f32 %v35
  %v40 = vcvt.s32.f32 %v36
  %v41 = vadd.f32 %v37, 0.0
  %v42 = vadd.f32 %v38, 0.0
  %v43 = vadd.f32 %v39, 0.0
  %v44 = vadd.f32 %v40, 0.0
  %45 = vset.pattern.permute.xlu0 1
  %46 = vperm.xlu0 %45, %v13
  %v47 = vpop.permute.xlu0 %46
  %48 = vset.pattern.permute.xlu0 1
  %49 = vperm.xlu0 %48, %v14
  %v50 = vpop.permute.xlu0 %49
  %51 = vset.pattern.permute.xlu0 1
  %52 = vperm.xlu0 %51, %v15
  %v53 = vpop.permute.xlu0 %52
  %54 = vset.pattern.permute.xlu0 1
  %55 = vperm.xlu0 %54, %v16
  %v56 = vpop.permute.xlu0 %55
  %vm57 = vcmp.eq.s32.totalorder %v47, %v12
  %vm58 = vcmp.eq.s32.totalorder %v50, %v12
  %vm59 = vcmp.eq.s32.totalorder %v53, %v12
  %vm60 = vcmp.eq.s32.totalorder %v56, %v12
  %v61 = vsel %vm57, 1, 0
  %v62 = vsel %vm58, 1, 0
  %v63 = vsel %vm59, 1, 0
  %v64 = vsel %vm60, 1, 0
  %v65 = vcvt.s32.f32 %v61
  %v66 = vcvt.s32.f32 %v62
  %v67 = vcvt.s32.f32 %v63
  %v68 = vcvt.s32.f32 %v64
  %v69 = vadd.f32 %v41, %v65
  %v70 = vadd.f32 %v42, %v66
  %v71 = vadd.f32 %v43, %v67
  %v72 = vadd.f32 %v44, %v68
  %73 = vset.pattern.permute.xlu0 2
  %74 = vperm.xlu0 %73, %v13
  %v75 = vpop.permute.xlu0 %74
  %76 = vset.pattern.permute.xlu0 2
  %77 = vperm.xlu0 %76, %v14
  %v78 = vpop.permute.xlu0 %77
  %79 = vset.pattern.permute.xlu0 2
  %80 = vperm.xlu0 %79, %v15
  %v81 = vpop.permute.xlu0 %80
  %82 = vset.pattern.permute.xlu0 2
  %83 = vperm.xlu0 %82, %v16
  %v84 = vpop.permute.xlu0 %83
  %vm85 = vcmp.eq.s32.totalorder %v75, %v12
  %vm86 = vcmp.eq.s32.totalorder %v78, %v12
  %vm87 = vcmp.eq.s32.totalorder %v81, %v12
  %vm88 = vcmp.eq.s32.totalorder %v84, %v12
  %v89 = vsel %vm85, 1, 0
  %v90 = vsel %vm86, 1, 0
  %v91 = vsel %vm87, 1, 0
  %v92 = vsel %vm88, 1, 0
  %v93 = vcvt.s32.f32 %v89
  %v94 = vcvt.s32.f32 %v90
  %v95 = vcvt.s32.f32 %v91
  %v96 = vcvt.s32.f32 %v92
  %v97 = vadd.f32 %v69, %v93
  %v98 = vadd.f32 %v70, %v94
  %v99 = vadd.f32 %v71, %v95
  %v100 = vadd.f32 %v72, %v96
  %101 = vset.pattern.permute.xlu0 3
  %102 = vperm.xlu0 %101, %v13
  %v103 = vpop.permute.xlu0 %102
  %104 = vset.pattern.permute.xlu0 3
  %105 = vperm.xlu0 %104, %v14
  %v106 = vpop.permute.xlu0 %105
  %107 = vset.pattern.permute.xlu0 3
  %108 = vperm.xlu0 %107, %v15
  %v109 = vpop.permute.xlu0 %108
  %110 = vset.pattern.permute.xlu0 3
  %111 = vperm.xlu0 %110, %v16
  %v112 = vpop.permute.xlu0 %111
  %vm113 = vcmp.eq.s32.totalorder %v103, %v12
  %vm114 = vcmp.eq.s32.totalorder %v106, %v12
  %vm115 = vcmp.eq.s32.totalorder %v109, %v12
  %vm116 = vcmp.eq.s32.totalorder %v112, %v12
  %v117 = vsel %vm113, 1, 0
  %v118 = vsel %vm114, 1, 0
  %v119 = vsel %vm115, 1, 0
  %v120 = vsel %vm116, 1, 0
  %v121 = vcvt.s32.f32 %v117
  %v122 = vcvt.s32.f32 %v118
  %v123 = vcvt.s32.f32 %v119
  %v124 = vcvt.s32.f32 %v120
  %v125 = vadd.f32 %v97, %v121
  %v126 = vadd.f32 %v98, %v122
  %v127 = vadd.f32 %v99, %v123
  %v128 = vadd.f32 %v100, %v124
  %v129 = vld [vmem:[%s1] sm:$0xff]
  %v130 = vld [vmem:[%s1 + $0x8] sm:$0xff]
  %v131 = vld [vmem:[%s1 + $0x10] sm:$0xff]
  %v132 = vld [vmem:[%s1 + $0x18] sm:$0xff]
  %v133 = vld [vmem:[%s1 + $0x20] sm:$0xff]
  %v134 = vld [vmem:[%s1 + $0x28] sm:$0xff]
  %v135 = vld [vmem:[%s1 + $0x30] sm:$0xff]
  %v136 = vld [vmem:[%s1 + $0x38] sm:$0xff]
  %vm137 = vcmask 523264
  %v139 = vsel %vm137, %v125, 0
  %v142 = vsel %vm137, %v126, 0
  %v145 = vsel %vm137, %v127, 0
  %v148 = vsel %vm137, %v128, 0
  %150 = vmatprep.subr.mxu0 0.0
  %151 = vmatpush1.msra.mxu0 0.0
  %152 = vmatprep.subr.mxu0 0.0
  %153 = vmatpush1.msra.mxu0 0.0
  %154 = vmatprep.subr.mxu0 0.0
  %155 = vmatpush1.msra.mxu0 0.0
  %156 = vmatprep.subr.mxu0 0.0
  %157 = vmatpush1.msra.mxu0 0.0
  %158 = vmatprep.subr.mxu0 0.0
  %159 = vmatpush1.msra.mxu0 0.0
  %160 = vmatprep.subr.mxu0 0.0
  %161 = vmatpush1.msra.mxu0 0.0
  %162 = vmatprep.subr.mxu0 0.0
  %163 = vmatpush1.msra.mxu0 0.0
  %164 = vmatprep.subr.mxu0 0.0
  %165 = vmatpush1.msra.mxu0 0.0
  %166 = vmatprep.subr.mxu0 0.0
  %167 = vmatpush1.msra.mxu0 %v136
  %168 = vmatprep.subr.mxu0 0.0
  %169 = vmatpush1.msra.mxu0 %v135
  %170 = vmatprep.subr.mxu0 0.0
  %171 = vmatpush1.msra.mxu0 %v134
  %172 = vmatprep.subr.mxu0 0.0
  %173 = vmatpush1.msra.mxu0 %v133
  %174 = vmatprep.subr.mxu0 0.0
  %175 = vmatpush1.msra.mxu0 %v132
  %176 = vmatprep.subr.mxu0 0.0
  %177 = vmatpush1.msra.mxu0 %v131
  %178 = vmatprep.subr.mxu0 0.0
  %179 = vmatpush1.msra.mxu0 %v130
  %180 = vmatprep.subr.mxu0 0.0
  %181 = vmatpush1.msra.mxu0 %v129
  %182 = vmatprep.subr.mxu0 0.0
  %183 = vmatpush2.msra.mxu0 0.0
  %184 = vmatprep.subr.mxu0 0.0
  %185 = vmatpush2.msra.mxu0 0.0
  %186 = vmatprep.subr.mxu0 0.0
  %187 = vmatpush2.msra.mxu0 0.0
  %188 = vmatprep.subr.mxu0 0.0
  %189 = vmatpush2.msra.mxu0 0.0
  %190 = vmatprep.subr.mxu0 0.0
  %191 = vmatpush2.msra.mxu0 0.0
  %192 = vmatprep.subr.mxu0 0.0
  %193 = vmatpush2.msra.mxu0 0.0
  %194 = vmatprep.subr.mxu0 0.0
  %195 = vmatpush2.msra.mxu0 0.0
  %196 = vmatprep.subr.mxu0 0.0
  %197 = vmatpush2.msra.mxu0 0.0
  %198 = vmatprep.subr.mxu0 0.0
  %199 = vmatpush2.msra.mxu0 0.0
  %200 = vmatprep.subr.mxu0 0.0
  %201 = vmatpush2.msra.mxu0 0.0
  %202 = vmatprep.subr.mxu0 0.0
  %203 = vmatpush2.msra.mxu0 0.0
  %204 = vmatprep.subr.mxu0 0.0
  %205 = vmatpush2.msra.mxu0 0.0
  %206 = vmatprep.subr.mxu0 0.0
  %207 = vmatpush2.msra.mxu0 0.0
  %208 = vmatprep.subr.mxu0 0.0
  %209 = vmatpush2.msra.mxu0 0.0
  %210 = vmatprep.subr.mxu0 0.0
  %211 = vmatpush2.msra.mxu0 0.0
  %212 = vmatprep.subr.mxu0 0.0
  %213 = vmatpush2.msra.mxu0 0.0
  %214 = vmatprep.mubr.f32.mxu0 0.0
  %215 = vmatmul.mubr.f32.gmra.mxu0 %v139
  %v216 = vpop.f32.mrf.mxu0
  %v217 = vadd.f32 0.0, %v216
  %v218 = vpop.f32.mrf.mxu0
  %219 = vmatprep.mubr.f32.mxu0 0.0
  %220 = vmatmul.mubr.f32.gmra.mxu0 %v142
  %v221 = vpop.f32.mrf.mxu0
  %v222 = vadd.f32 0.0, %v221
  %v223 = vpop.f32.mrf.mxu0
  %224 = vmatprep.mubr.f32.mxu0 0.0
  %225 = vmatmul.mubr.f32.gmra.mxu0 %v145
  %v226 = vpop.f32.mrf.mxu0
  %v227 = vadd.f32 0.0, %v226
  %v228 = vpop.f32.mrf.mxu0
  %229 = vmatprep.mubr.f32.mxu0 0.0
  %230 = vmatmul.mubr.f32.gmra.mxu0 %v148
  %v231 = vpop.f32.mrf.mxu0
  %v232 = vadd.f32 0.0, %v231
  %v233 = vpop.f32.mrf.mxu0
  %234 = vdwg.mxu0
  %235 = vst [vmem:[%s2] sm:$0xff] %v217
  %236 = vst [vmem:[%s2 + $0x8] sm:$0xff] %v222
  %237 = vst [vmem:[%s2 + $0x10] sm:$0xff] %v227
  %238 = vst [vmem:[%s2 + $0x18] sm:$0xff] %v232
  // Predicated region
  $region10: #{type_dict_edge_encoder.1} parent=0 // pred_check
    _
  $region11: #{type_dict_edge_encoder.1} parent=0 // pred_check_branch
    %240 = sbr.rel (0) target = $region13
  $region12: #{type_dict_edge_encoder.1} parent=0 // pred_region
    _
  $region13: #{type_dict_edge_encoder.1} parent=0 // pred_fallthru
    _
  // Predicated region
  $region14: #{type_dict_edge_encoder.1} parent=0 // pred_check
    _
  $region15: #{type_dict_edge_encoder.1} parent=0 // pred_check_branch
    %242 = sbr.rel (0) target = $region17
  $region16: #{type_dict_edge_encoder.1} parent=0 // pred_region
    _
  $region17: #{type_dict_edge_encoder.1} parent=0 // pred_fallthru
    _

</llo_original>
